<compile_context>
chip_gen: v6e
topology: v6e:2x2x1
jax: 0.10.0
libtpu: 0.0.40
codegen_flags: <defaults>
</compile_context>

<pallas_src>
import functools

import jax
import jax.numpy as jnp
from jax.experimental import pallas as pl
from jax.experimental.pallas import tpu as pltpu


def _round_up(x, m):
    return ((x + m - 1) // m) * m


def _sf_net_kernel(x_ref, w_ref, b_ref, o_ref, *, F, OUT, mxu_dtype):
    """Fused 4-layer forward on one batch tile, batch on the sublane axis.

    x_ref: (bt, F)            -- input tile (natural layout, no transpose)
    w_ref: (F, 3F + OUT)      -- packed, transposed, zero-padded weights (mxu_dtype)
    b_ref: (1, 3F + OUT)      -- packed, zero-padded biases (f32)
    o_ref: (bt, OUT)          -- output tile, stored in final layout
    """
    x = x_ref[...].astype(mxu_dtype)

    # Static column slices of the packed weight / bias blocks (zero runtime cost).
    w0 = w_ref[:, 0 * F:1 * F]            # (F, F)   cols >= F/2 are zero
    w1 = w_ref[:, 1 * F:2 * F]            # (F, F)   rows >= F/2 are zero
    w2 = w_ref[:, 2 * F:3 * F]            # (F, F)   cols >= F/2 are zero
    w3 = w_ref[:, 3 * F:3 * F + OUT]      # (F, OUT) rows >= F/2 are zero
    b0 = b_ref[:, 0 * F:1 * F]            # (1, F) -> broadcast over rows
    b1 = b_ref[:, 1 * F:2 * F]
    b2 = b_ref[:, 2 * F:3 * F]
    b3 = b_ref[:, 3 * F:3 * F + OUT]

    # MXU in mxu_dtype with f32 accumulate; bias add + tanh in f32 (v5e-safe).
    h = jnp.tanh(jnp.dot(x, w0, preferred_element_type=jnp.float32) + b0)
    h = jnp.tanh(jnp.dot(h.astype(mxu_dtype), w1,
                         preferred_element_type=jnp.float32) + b1)
    h = jnp.tanh(jnp.dot(h.astype(mxu_dtype), w2,
                         preferred_element_type=jnp.float32) + b2)
    out = jnp.dot(h.astype(mxu_dtype), w3,
                  preferred_element_type=jnp.float32) + b3
    o_ref[...] = out.astype(o_ref.dtype)        # lane-dense final-layout store


@functools.partial(jax.jit, static_argnames=("batch_tile", "mxu_dtype", "out_dtype"))
def sf_net_forward(x, params, *, batch_tile=None, mxu_dtype=jnp.bfloat16,
                   out_dtype=None):
    """x: (B, input_size). params: PyTorch-layout weights w_i (out,in), biases b_i (out,).

    mxu_dtype=bf16 is a documented inference-speed choice (error ~1e-2 vs the
    f32 PyTorch reference); pass jnp.float32 for tight numerical agreement.
    out_dtype (default: x.dtype) can be bf16 to halve the dominant output stream.
    """
    B, F = x.shape
    OUT = params["w3"].shape[0]           # SF_NUM * input_size
    if out_dtype is None:
        out_dtype = x.dtype

    # --- batch tiling: bounded padding, >=4 tiles once B permits --------------
    if batch_tile is None:
        # >=4 grid steps => both v7x TensorCores get >=2 pipelined steps each;
        # <=~4096 rows/tile keeps VMEM well under the 32 MiB scoped default;
        # 8-row granularity (batch is on sublanes) bounds padding waste.
        num_tiles = max(4, pl.cdiv(B, 4096))
        batch_tile = max(8, _round_up(pl.cdiv(B, num_tiles), 8))
    else:
        batch_tile = max(8, _round_up(batch_tile, 8))
    B_pad = _round_up(B, batch_tile)
    grid = (B_pad // batch_tile,)

    # --- pack transposed weights / biases into single resident arrays ---------
    # Each W^T is zero-padded to contraction height F; padded cols of one layer
    # produce tanh(0)=0 activations that meet the next layer's zero-padded rows,
    # so the math is unchanged.
    def padT(w, rows, cols):
        wT = w.T
        return jnp.pad(wT, ((0, rows - wT.shape[0]), (0, cols - wT.shape[1])))

    def pad1(b, n):
        return jnp.pad(b, (0, n - b.shape[0]))

    w_packed = jnp.concatenate([
        padT(params["w0"], F, F),
        padT(params["w1"], F, F),
        padT(params["w2"], F, F),
        padT(params["w3"], F, OUT),
    ], axis=1).astype(mxu_dtype)                      # (F, 3F + OUT)
    b_packed = jnp.concatenate([
        pad1(params["b0"], F),
        pad1(params["b1"], F),
        pad1(params["b2"], F),
        pad1(params["b3"], OUT),
    ])[None, :].astype(jnp.float32)                   # (1, 3F + OUT)

    # --- input: natural (B, F) layout; pad only if B is not tile-aligned ------
    x_in = x if B_pad == B else jnp.pad(x, ((0, B_pad - B), (0, 0)))

    kernel = functools.partial(_sf_net_kernel, F=F, OUT=OUT, mxu_dtype=mxu_dtype)

    out = pl.pallas_call(
        kernel,
        out_shape=jax.ShapeDtypeStruct((B_pad, OUT), out_dtype),
        grid=grid,
        in_specs=[
            pl.BlockSpec((batch_tile, F), lambda i: (i, 0)),   # x tile (pipelined)
            pl.BlockSpec(w_packed.shape, lambda i: (0, 0)),    # weights: resident
            pl.BlockSpec(b_packed.shape, lambda i: (0, 0)),    # biases:  resident
        ],
        out_specs=pl.BlockSpec((batch_tile, OUT), lambda i: (i, 0)),
        compiler_params=pltpu.CompilerParams(
            dimension_semantics=("parallel",),        # megacore sharding on v7x
        ),
    )(x_in, w_packed, b_packed)

    return out if B_pad == B else out[:B]             # no transpose, slice only if padded


def init_sf_net_params(key, input_size, sf_num, dtype=jnp.float32):
    """PyTorch nn.Linear layout: weight (out, in), bias (out,), U(-1/sqrt(fan_in), ...)."""
    half = input_size // 2
    dims = [
        (half, input_size),              # sf_input_layer
        (input_size, half),              # sf_hid1_layer
        (half, input_size),              # sf_hid2_layer
        (sf_num * input_size, half),     # sf_output_layer
    ]
    params = {}
    keys = jax.random.split(key, 2 * len(dims))
    for li, (fan_out, fan_in) in enumerate(dims):
        bound = 1.0 / (fan_in ** 0.5)
        params[f"w{li}"] = jax.random.uniform(
            keys[2 * li], (fan_out, fan_in), minval=-bound, maxval=bound, dtype=dtype)
        params[f"b{li}"] = jax.random.uniform(
            keys[2 * li + 1], (fan_out,), minval=-bound, maxval=bound, dtype=dtype)
    return params


def sf_net_reference(x, params):
    """Pure-JAX reference of the PyTorch forward."""
    h = jnp.tanh(x @ params["w0"].T + params["b0"])
    h = jnp.tanh(h @ params["w1"].T + params["b1"])
    h = jnp.tanh(h @ params["w2"].T + params["b2"])
    return h @ params["w3"].T + params["b3"]


if __name__ == "__main__":
    # Small shapes consistent with the module's forward: x is (batch, input_size).
    INPUT_SIZE = 32
    SF_NUM = 4
    BATCH = 8

    key = jax.random.PRNGKey(0)
    k_x, k_p, k_x2 = jax.random.split(key, 3)
    x = jax.random.normal(k_x, (BATCH, INPUT_SIZE), dtype=jnp.float32)
    params = init_sf_net_params(k_p, INPUT_SIZE, SF_NUM)

    ref = sf_net_reference(x, params)

    # f32 MXU path: matches the f32 reference tightly.
    out_f32 = jax.block_until_ready(sf_net_forward(x, params, mxu_dtype=jnp.float32))
    assert out_f32.shape == (BATCH, SF_NUM * INPUT_SIZE), out_f32.shape
    assert jnp.allclose(out_f32, ref, atol=1e-5, rtol=1e-5), "f32 path mismatch vs reference"

    # Default bf16-MXU path (fast path on v6e/v7x; tanh-bounded activations keep error benign).
    out_bf16 = jax.block_until_ready(sf_net_forward(x, params))
    assert out_bf16.shape == (BATCH, SF_NUM * INPUT_SIZE), out_bf16.shape
    assert jnp.allclose(out_bf16, ref, atol=3e-2, rtol=3e-2), "bf16 path mismatch vs reference"

    # bf16 output stream (halves the dominant HBM stream; f32 math kept in-kernel).
    out_bf16_store = jax.block_until_ready(
        sf_net_forward(x, params, out_dtype=jnp.bfloat16))
    assert out_bf16_store.dtype == jnp.bfloat16
    assert jnp.allclose(out_bf16_store.astype(jnp.float32), ref, atol=5e-2, rtol=5e-2)

    # Non-aligned batch to exercise the multi-tile grid + bounded padding path.
    B2 = 300
    x2 = jax.random.normal(k_x2, (B2, INPUT_SIZE), dtype=jnp.float32)
    ref2 = sf_net_reference(x2, params)
    out2 = jax.block_until_ready(sf_net_forward(x2, params, mxu_dtype=jnp.float32))
    assert out2.shape == (B2, SF_NUM * INPUT_SIZE), out2.shape
    assert jnp.allclose(out2, ref2, atol=1e-5, rtol=1e-5), "tiled path mismatch vs reference"

    print("KERNEL_OK")
</pallas_src>

<mosaic_0001>
module attributes {stable_mosaic.version = 11 : i64} {
  func.func @_sf_net_kernel(%arg0: i32, %arg1: memref<8x32xf32, #tpu.memory_space<vmem>>, %arg2: memref<32x224xf32, #tpu.memory_space<vmem>>, %arg3: memref<1x224xf32, #tpu.memory_space<vmem>>, %arg4: memref<8x128xf32, #tpu.memory_space<vmem>>) attributes {dimension_semantics = [#tpu.dimension_semantics<parallel>], iteration_bounds = array<i64: 1>, scalar_prefetch = 0 : i64, scratch_operands = 0 : i64, tpu.core_type = #tpu.core_type<tc>, window_params = [{transform_indices = @transform_0, window_bounds = array<i64: 8, 32>}, {pipeline_mode = #tpu.pipeline_mode<synchronous>, transform_indices = @transform_1, window_bounds = array<i64: 32, 224>}, {pipeline_mode = #tpu.pipeline_mode<synchronous>, transform_indices = @transform_2, window_bounds = array<i64: 1, 224>}, {transform_indices = @transform_3, window_bounds = array<i64: 8, 128>}]} {
    %c0 = arith.constant 0 : index
    %c0_0 = arith.constant 0 : index
    %0 = vector.load %arg1[%c0, %c0_0] : memref<8x32xf32, #tpu.memory_space<vmem>>, vector<8x32xf32>
    %c0_1 = arith.constant 0 : index
    %c0_2 = arith.constant 0 : index
    %1 = vector.load %arg2[%c0_1, %c0_2] : memref<32x224xf32, #tpu.memory_space<vmem>>, vector<32x32xf32>
    %c0_3 = arith.constant 0 : index
    %c32 = arith.constant 32 : index
    %2 = vector.load %arg2[%c0_3, %c32] : memref<32x224xf32, #tpu.memory_space<vmem>>, vector<32x32xf32>
    %c0_4 = arith.constant 0 : index
    %c64 = arith.constant 64 : index
    %3 = vector.load %arg2[%c0_4, %c64] : memref<32x224xf32, #tpu.memory_space<vmem>>, vector<32x32xf32>
    %c0_5 = arith.constant 0 : index
    %c96 = arith.constant 96 : index
    %4 = vector.load %arg2[%c0_5, %c96] : memref<32x224xf32, #tpu.memory_space<vmem>>, vector<32x128xf32>
    %c0_6 = arith.constant 0 : index
    %c0_7 = arith.constant 0 : index
    %5 = vector.load %arg3[%c0_6, %c0_7] : memref<1x224xf32, #tpu.memory_space<vmem>>, vector<1x32xf32>
    %c0_8 = arith.constant 0 : index
    %c32_9 = arith.constant 32 : index
    %6 = vector.load %arg3[%c0_8, %c32_9] : memref<1x224xf32, #tpu.memory_space<vmem>>, vector<1x32xf32>
    %c0_10 = arith.constant 0 : index
    %c64_11 = arith.constant 64 : index
    %7 = vector.load %arg3[%c0_10, %c64_11] : memref<1x224xf32, #tpu.memory_space<vmem>>, vector<1x32xf32>
    %c0_12 = arith.constant 0 : index
    %c96_13 = arith.constant 96 : index
    %8 = vector.load %arg3[%c0_12, %c96_13] : memref<1x224xf32, #tpu.memory_space<vmem>>, vector<1x128xf32>
    %cst = arith.constant dense<0.000000e+00> : vector<8x32xf32>
    %9 = tpu.matmul %0, %1, %cst {dimension_numbers = #tpu.dot_dimension_numbers<[1], [0], [0], [1], [0, 0, 1, 1], [], []>} : vector<8x32xf32>, vector<32x32xf32>, vector<8x32xf32> -> vector<8x32xf32>
    %10 = vector.broadcast %5 : vector<1x32xf32> to vector<8x32xf32>
    %11 = arith.addf %9, %10 : vector<8x32xf32>
    %12 = math.tanh %11 : vector<8x32xf32>
    %cst_14 = arith.constant dense<0.000000e+00> : vector<8x32xf32>
    %13 = tpu.matmul %12, %2, %cst_14 {dimension_numbers = #tpu.dot_dimension_numbers<[1], [0], [0], [1], [0, 0, 1, 1], [], []>} : vector<8x32xf32>, vector<32x32xf32>, vector<8x32xf32> -> vector<8x32xf32>
    %14 = vector.broadcast %6 : vector<1x32xf32> to vector<8x32xf32>
    %15 = arith.addf %13, %14 : vector<8x32xf32>
    %16 = math.tanh %15 : vector<8x32xf32>
    %cst_15 = arith.constant dense<0.000000e+00> : vector<8x32xf32>
    %17 = tpu.matmul %16, %3, %cst_15 {dimension_numbers = #tpu.dot_dimension_numbers<[1], [0], [0], [1], [0, 0, 1, 1], [], []>} : vector<8x32xf32>, vector<32x32xf32>, vector<8x32xf32> -> vector<8x32xf32>
    %18 = vector.broadcast %7 : vector<1x32xf32> to vector<8x32xf32>
    %19 = arith.addf %17, %18 : vector<8x32xf32>
    %20 = math.tanh %19 : vector<8x32xf32>
    %cst_16 = arith.constant dense<0.000000e+00> : vector<8x128xf32>
    %21 = tpu.matmul %20, %4, %cst_16 {dimension_numbers = #tpu.dot_dimension_numbers<[1], [0], [0], [1], [0, 0, 1, 1], [], []>} : vector<8x32xf32>, vector<32x128xf32>, vector<8x128xf32> -> vector<8x128xf32>
    %22 = vector.broadcast %8 : vector<1x128xf32> to vector<8x128xf32>
    %23 = arith.addf %21, %22 : vector<8x128xf32>
    %c0_17 = arith.constant 0 : index
    %c0_18 = arith.constant 0 : index
    %24 = vector.load %arg4[%c0_17, %c0_18] : memref<8x128xf32, #tpu.memory_space<vmem>>, vector<8x128xf32>
    tpu.vector_store %arg4[%c0_17, %c0_18], %23 {strides = array<i32>} : memref<8x128xf32, #tpu.memory_space<vmem>>, vector<8x128xf32>,
    return
  }
  func.func @transform_0(%arg0: i32) -> (i32, i32) {
    %c0_i32 = arith.constant 0 : i32
    %c0_i32_0 = arith.constant 0 : i32
    return %arg0, %c0_i32 : i32, i32
  }
  func.func @transform_1(%arg0: i32) -> (i32, i32) {
    %c0_i32 = arith.constant 0 : i32
    %c0_i32_0 = arith.constant 0 : i32
    %c0_i32_1 = arith.constant 0 : i32
    return %c0_i32, %c0_i32_0 : i32, i32
  }
  func.func @transform_2(%arg0: i32) -> (i32, i32) {
    %c0_i32 = arith.constant 0 : i32
    %c0_i32_0 = arith.constant 0 : i32
    %c0_i32_1 = arith.constant 0 : i32
    return %c0_i32, %c0_i32_0 : i32, i32
  }
  func.func @transform_3(%arg0: i32) -> (i32, i32) {
    %c0_i32 = arith.constant 0 : i32
    %c0_i32_0 = arith.constant 0 : i32
    return %arg0, %c0_i32 : i32, i32
  }
}

</mosaic_0001>

<llo_original>
// kernel: sf_net_forward.1
$region0: #{sf_net_forward.1}
  #allocation0 [shape = 'u32[]', space=smem, size = 0x4, offset = 0x4, fixed_abs, tag = 'smem constant byte address 0x4 - core index']
  #allocation1 [shape = 'u32[144,128]{1,0:T(1,128)}', space=vmem, size = 0x12000, scoped, tag = 'internal scratch']
  %s0 = inlined_call_operand.vmem [shape: f32[8,32], index: 0, kind: input, shape index: {}]
  %s1 = inlined_call_operand.vmem [shape: f32[32,224], index: 1, kind: input, shape index: {}]
  %s2 = inlined_call_operand.vmem [shape: f32[1,224], index: 2, kind: input, shape index: {}]
  %s3 = inlined_call_operand.hbm [shape: f32[8,128], index: 3, kind: output, shape index: {}]
  %s4 = sld [smem:[#allocation0]]
  $region22: #{sf_net_forward.1} parent=0
    _
  %s6 = ssub.s32 1, %s4
  %s7 = scalar_select 0, %s6, %s4
  $region1: #{sf_net_forward.1} parent=0
    #allocation2 [shape = 'u8[4096]{0}', space=vmem, size = 0x1000, scoped, tag = 'output window, operand 0, single buffered']
    #allocation3 [shape = 's32[1]{0}', space=sflag, size = 0x4, scoped, tag = 'scoped memory for sf_net_forward.1']
    %8 = vsyncpa [#allocation3], 0
    // Predicated region
    $region2: #{sf_net_forward.1} parent=1 // pred_check
      _
    $region3: #{sf_net_forward.1} parent=1 // pred_check_branch
      %10 = sbr.rel (0) target = $region5
    $region4: #{sf_net_forward.1} parent=1 // pred_region
      _
    $region5: #{sf_net_forward.1} parent=1 // pred_fallthru
      _
    // Predicated region
    $region6: #{sf_net_forward.1} parent=1 // pred_check
      _
    $region7: #{sf_net_forward.1} parent=1 // pred_check_branch
      %12 = sbr.rel (0) target = $region9
    $region8: #{sf_net_forward.1} parent=1 // pred_region
      _
    $region9: #{sf_net_forward.1} parent=1 // pred_fallthru
      _
    // Predicated region
    $region10: #{sf_net_forward.1} parent=1 // pred_check
      _
    $region11: #{sf_net_forward.1} parent=1 // pred_check_branch
      %14 = sbr.rel (0) target = $region13
    $region12: #{sf_net_forward.1} parent=1 // pred_region
      _
    $region13: #{sf_net_forward.1} parent=1 // pred_fallthru
      _
    %v15 = vld [vmem:[%s0] sm:$0xff]
    %v16 = vld [vmem:[%s1] sm:$0xff]
    %v17 = vld [vmem:[%s1 + $0x10] sm:$0xff]
    %v18 = vld [vmem:[%s1 + $0x20] sm:$0xff]
    %v19 = vld [vmem:[%s1 + $0x30] sm:$0xff]
    %v20 = vld [vmem:[%s1 + $0x8] sm:$0xff]
    %v21 = vld [vmem:[%s1 + $0x18] sm:$0xff]
    %v22 = vld [vmem:[%s1 + $0x28] sm:$0xff]
    %v23 = vld [vmem:[%s1 + $0x38] sm:$0xff]
    %v24 = vld [vmem:[%s2] sm:$0x1]
    %v25 = vld [vmem:[%s2] sm:$0x3]
    %v27 = vlaneseq
    %v28 = vshrl.u32 %v27, 7
    %v29 = vsub.s32 0, %v28
    %v30 = vrot.slane %v24, %v29
    %vm32 = vcmask 261120
    %v34 = vsel %vm32, %v15, 0
    %36 = vmatprep.subr.mxu0 0.0
    %37 = vmatpush1.msra.mxu0 0.0
    %38 = vmatprep.subr.mxu0 0.0
    %39 = vmatpush1.msra.mxu0 0.0
    %40 = vmatprep.subr.mxu0 0.0
    %41 = vmatpush1.msra.mxu0 0.0
    %42 = vmatprep.subr.mxu0 0.0
    %43 = vmatpush1.msra.mxu0 0.0
    %44 = vmatprep.subr.mxu0 0.0
    %45 = vmatpush1.msra.mxu0 0.0
    %46 = vmatprep.subr.mxu0 0.0
    %47 = vmatpush1.msra.mxu0 0.0
    %48 = vmatprep.subr.mxu0 0.0
    %49 = vmatpush1.msra.mxu0 0.0
    %50 = vmatprep.subr.mxu0 0.0
    %51 = vmatpush1.msra.mxu0 0.0
    %52 = vmatprep.subr.mxu0 0.0
    %53 = vmatpush1.msra.mxu0 0.0
    %54 = vmatprep.subr.mxu0 0.0
    %55 = vmatpush1.msra.mxu0 0.0
    %56 = vmatprep.subr.mxu0 0.0
    %57 = vmatpush1.msra.mxu0 0.0
    %58 = vmatprep.subr.mxu0 0.0
    %59 = vmatpush1.msra.mxu0 0.0
    %60 = vmatprep.subr.mxu0 0.0
    %61 = vmatpush1.msra.mxu0 %v19
    %62 = vmatprep.subr.mxu0 0.0
    %63 = vmatpush1.msra.mxu0 %v18
    %64 = vmatprep.subr.mxu0 0.0
    %65 = vmatpush1.msra.mxu0 %v17
    %66 = vmatprep.subr.mxu0 0.0
    %67 = vmatpush1.msra.mxu0 %v16
    %68 = vmatprep.subr.mxu0 0.0
    %69 = vmatpush2.msra.mxu0 0.0
    %70 = vmatprep.subr.mxu0 0.0
    %71 = vmatpush2.msra.mxu0 0.0
    %72 = vmatprep.subr.mxu0 0.0
    %73 = vmatpush2.msra.mxu0 0.0
    %74 = vmatprep.subr.mxu0 0.0
    %75 = vmatpush2.msra.mxu0 0.0
    %76 = vmatprep.subr.mxu0 0.0
    %77 = vmatpush2.msra.mxu0 0.0
    %78 = vmatprep.subr.mxu0 0.0
    %79 = vmatpush2.msra.mxu0 0.0
    %80 = vmatprep.subr.mxu0 0.0
    %81 = vmatpush2.msra.mxu0 0.0
    %82 = vmatprep.subr.mxu0 0.0
    %83 = vmatpush2.msra.mxu0 0.0
    %84 = vmatprep.subr.mxu0 0.0
    %85 = vmatpush2.msra.mxu0 0.0
    %86 = vmatprep.subr.mxu0 0.0
    %87 = vmatpush2.msra.mxu0 0.0
    %88 = vmatprep.subr.mxu0 0.0
    %89 = vmatpush2.msra.mxu0 0.0
    %90 = vmatprep.subr.mxu0 0.0
    %91 = vmatpush2.msra.mxu0 0.0
    %92 = vmatprep.subr.mxu0 0.0
    %93 = vmatpush2.msra.mxu0 0.0
    %94 = vmatprep.subr.mxu0 0.0
    %95 = vmatpush2.msra.mxu0 0.0
    %96 = vmatprep.subr.mxu0 0.0
    %97 = vmatpush2.msra.mxu0 0.0
    %98 = vmatprep.subr.mxu0 0.0
    %99 = vmatpush2.msra.mxu0 0.0
    %100 = vmatprep.mubr.f32.mxu0 0.0
    %101 = vmatmul.mubr.f32.gmra.mxu0 %v34
    %v102 = vpop.f32.mrf.mxu0
    %v103 = vadd.f32 %v30, %v102
    %v104 = vpop.f32.mrf.mxu0
    %105 = vdwg.mxu0
    %v106 = vtanh.pop %v103
    %111 = vrot.lane.b32.xlu0 %v16, 96
    %v112 = vpop.permute.xlu0 %111
    %113 = vrot.lane.b32.xlu0 %v17, 96
    %v114 = vpop.permute.xlu0 %113
    %115 = vrot.lane.b32.xlu0 %v18, 96
    %v116 = vpop.permute.xlu0 %115
    %117 = vrot.lane.b32.xlu0 %v19, 96
    %v118 = vpop.permute.xlu0 %117
    %123 = vrot.lane.b32.xlu0 %v30, 96
    %v124 = vpop.permute.xlu0 %123
    %v127 = vsel %vm32, %v106, 0
    %129 = vmatprep.subr.mxu0 0.0
    %130 = vmatpush1.msra.mxu0 0.0
    %131 = vmatprep.subr.mxu0 0.0
    %132 = vmatpush1.msra.mxu0 0.0
    %133 = vmatprep.subr.mxu0 0.0
    %134 = vmatpush1.msra.mxu0 0.0
    %135 = vmatprep.subr.mxu0 0.0
    %136 = vmatpush1.msra.mxu0 0.0
    %137 = vmatprep.subr.mxu0 0.0
    %138 = vmatpush1.msra.mxu0 0.0
    %139 = vmatprep.subr.mxu0 0.0
    %140 = vmatpush1.msra.mxu0 0.0
    %141 = vmatprep.subr.mxu0 0.0
    %142 = vmatpush1.msra.mxu0 0.0
    %143 = vmatprep.subr.mxu0 0.0
    %144 = vmatpush1.msra.mxu0 0.0
    %145 = vmatprep.subr.mxu0 0.0
    %146 = vmatpush1.msra.mxu0 0.0
    %147 = vmatprep.subr.mxu0 0.0
    %148 = vmatpush1.msra.mxu0 0.0
    %149 = vmatprep.subr.mxu0 0.0
    %150 = vmatpush1.msra.mxu0 0.0
    %151 = vmatprep.subr.mxu0 0.0
    %152 = vmatpush1.msra.mxu0 0.0
    %153 = vmatprep.subr.mxu0 0.0
    %154 = vmatpush1.msra.mxu0 %v118
    %155 = vmatprep.subr.mxu0 0.0
    %156 = vmatpush1.msra.mxu0 %v116
    %157 = vmatprep.subr.mxu0 0.0
    %158 = vmatpush1.msra.mxu0 %v114
    %159 = vmatprep.subr.mxu0 0.0
    %160 = vmatpush1.msra.mxu0 %v112
    %161 = vmatprep.subr.mxu0 0.0
    %162 = vmatpush2.msra.mxu0 0.0
    %163 = vmatprep.subr.mxu0 0.0
    %164 = vmatpush2.msra.mxu0 0.0
    %165 = vmatprep.subr.mxu0 0.0
    %166 = vmatpush2.msra.mxu0 0.0
    %167 = vmatprep.subr.mxu0 0.0
    %168 = vmatpush2.msra.mxu0 0.0
    %169 = vmatprep.subr.mxu0 0.0
    %170 = vmatpush2.msra.mxu0 0.0
    %171 = vmatprep.subr.mxu0 0.0
    %172 = vmatpush2.msra.mxu0 0.0
    %173 = vmatprep.subr.mxu0 0.0
    %174 = vmatpush2.msra.mxu0 0.0
    %175 = vmatprep.subr.mxu0 0.0
    %176 = vmatpush2.msra.mxu0 0.0
    %177 = vmatprep.subr.mxu0 0.0
    %178 = vmatpush2.msra.mxu0 0.0
    %179 = vmatprep.subr.mxu0 0.0
    %180 = vmatpush2.msra.mxu0 0.0
    %181 = vmatprep.subr.mxu0 0.0
    %182 = vmatpush2.msra.mxu0 0.0
    %183 = vmatprep.subr.mxu0 0.0
    %184 = vmatpush2.msra.mxu0 0.0
    %185 = vmatprep.subr.mxu0 0.0
    %186 = vmatpush2.msra.mxu0 0.0
    %187 = vmatprep.subr.mxu0 0.0
    %188 = vmatpush2.msra.mxu0 0.0
    %189 = vmatprep.subr.mxu0 0.0
    %190 = vmatpush2.msra.mxu0 0.0
    %191 = vmatprep.subr.mxu0 0.0
    %192 = vmatpush2.msra.mxu0 0.0
    %193 = vmatprep.mubr.f32.mxu0 0.0
    %194 = vmatmul.mubr.f32.gmra.mxu0 %v127
    %v195 = vpop.f32.mrf.mxu0
    %v196 = vadd.f32 %v124, %v195
    %v197 = vpop.f32.mrf.mxu0
    %198 = vdwg.mxu0
    %v199 = vtanh.pop %v196
    %200 = vrot.lane.b32.xlu0 %v16, 64
    %v201 = vpop.permute.xlu0 %200
    %202 = vrot.lane.b32.xlu0 %v17, 64
    %v203 = vpop.permute.xlu0 %202
    %204 = vrot.lane.b32.xlu0 %v18, 64
    %v205 = vpop.permute.xlu0 %204
    %206 = vrot.lane.b32.xlu0 %v19, 64
    %v207 = vpop.permute.xlu0 %206
    %212 = vrot.lane.b32.xlu0 %v30, 64
    %v213 = vpop.permute.xlu0 %212
    %v216 = vsel %vm32, %v199, 0
    %218 = vmatprep.subr.mxu0 0.0
    %219 = vmatpush1.msra.mxu0 0.0
    %220 = vmatprep.subr.mxu0 0.0
    %221 = vmatpush1.msra.mxu0 0.0
    %222 = vmatprep.subr.mxu0 0.0
    %223 = vmatpush1.msra.mxu0 0.0
    %224 = vmatprep.subr.mxu0 0.0
    %225 = vmatpush1.msra.mxu0 0.0
    %226 = vmatprep.subr.mxu0 0.0
    %227 = vmatpush1.msra.mxu0 0.0
    %228 = vmatprep.subr.mxu0 0.0
    %229 = vmatpush1.msra.mxu0 0.0
    %230 = vmatprep.subr.mxu0 0.0
    %231 = vmatpush1.msra.mxu0 0.0
    %232 = vmatprep.subr.mxu0 0.0
    %233 = vmatpush1.msra.mxu0 0.0
    %234 = vmatprep.subr.mxu0 0.0
    %235 = vmatpush1.msra.mxu0 0.0
    %236 = vmatprep.subr.mxu0 0.0
    %237 = vmatpush1.msra.mxu0 0.0
    %238 = vmatprep.subr.mxu0 0.0
    %239 = vmatpush1.msra.mxu0 0.0
    %240 = vmatprep.subr.mxu0 0.0
    %241 = vmatpush1.msra.mxu0 0.0
    %242 = vmatprep.subr.mxu0 0.0
    %243 = vmatpush1.msra.mxu0 %v207
    %244 = vmatprep.subr.mxu0 0.0
    %245 = vmatpush1.msra.mxu0 %v205
    %246 = vmatprep.subr.mxu0 0.0
    %247 = vmatpush1.msra.mxu0 %v203
    %248 = vmatprep.subr.mxu0 0.0
    %249 = vmatpush1.msra.mxu0 %v201
    %250 = vmatprep.subr.mxu0 0.0
    %251 = vmatpush2.msra.mxu0 0.0
    %252 = vmatprep.subr.mxu0 0.0
    %253 = vmatpush2.msra.mxu0 0.0
    %254 = vmatprep.subr.mxu0 0.0
    %255 = vmatpush2.msra.mxu0 0.0
    %256 = vmatprep.subr.mxu0 0.0
    %257 = vmatpush2.msra.mxu0 0.0
    %258 = vmatprep.subr.mxu0 0.0
    %259 = vmatpush2.msra.mxu0 0.0
    %260 = vmatprep.subr.mxu0 0.0
    %261 = vmatpush2.msra.mxu0 0.0
    %262 = vmatprep.subr.mxu0 0.0
    %263 = vmatpush2.msra.mxu0 0.0
    %264 = vmatprep.subr.mxu0 0.0
    %265 = vmatpush2.msra.mxu0 0.0
    %266 = vmatprep.subr.mxu0 0.0
    %267 = vmatpush2.msra.mxu0 0.0
    %268 = vmatprep.subr.mxu0 0.0
    %269 = vmatpush2.msra.mxu0 0.0
    %270 = vmatprep.subr.mxu0 0.0
    %271 = vmatpush2.msra.mxu0 0.0
    %272 = vmatprep.subr.mxu0 0.0
    %273 = vmatpush2.msra.mxu0 0.0
    %274 = vmatprep.subr.mxu0 0.0
    %275 = vmatpush2.msra.mxu0 0.0
    %276 = vmatprep.subr.mxu0 0.0
    %277 = vmatpush2.msra.mxu0 0.0
    %278 = vmatprep.subr.mxu0 0.0
    %279 = vmatpush2.msra.mxu0 0.0
    %280 = vmatprep.subr.mxu0 0.0
    %281 = vmatpush2.msra.mxu0 0.0
    %282 = vmatprep.mubr.f32.mxu0 0.0
    %283 = vmatmul.mubr.f32.gmra.mxu0 %v216
    %v284 = vpop.f32.mrf.mxu0
    %v285 = vadd.f32 %v213, %v284
    %v286 = vpop.f32.mrf.mxu0
    %287 = vdwg.mxu0
    %v288 = vtanh.pop %v285
    %v290 = vlaneseq
    %v291 = vshrl.u32 %v290, 7
    %v292 = vsub.s32 0, %v291
    %v293 = vrot.slane %v25, %v292
    %v294 = vlaneseq
    %v295 = vshrl.u32 %v294, 7
    %v296 = vsub.s32 1, %v295
    %v297 = vrot.slane %v25, %v296
    %302 = vrot.lane.b32.xlu0 %v16, 32
    %v303 = vpop.permute.xlu0 %302
    %304 = vrot.lane.b32.xlu0 %v20, 32
    %v305 = vpop.permute.xlu0 %304
    %306 = vrot.lane.b32.xlu0 %v17, 32
    %v307 = vpop.permute.xlu0 %306
    %308 = vrot.lane.b32.xlu0 %v21, 32
    %v309 = vpop.permute.xlu0 %308
    %310 = vrot.lane.b32.xlu0 %v18, 32
    %v311 = vpop.permute.xlu0 %310
    %312 = vrot.lane.b32.xlu0 %v22, 32
    %v313 = vpop.permute.xlu0 %312
    %314 = vrot.lane.b32.xlu0 %v19, 32
    %v315 = vpop.permute.xlu0 %314
    %316 = vrot.lane.b32.xlu0 %v23, 32
    %v317 = vpop.permute.xlu0 %316
    %v318 = vsel %vm32, %v303, %v305
    %v319 = vsel %vm32, %v307, %v309
    %v320 = vsel %vm32, %v311, %v313
    %v321 = vsel %vm32, %v315, %v317
    %326 = vrot.lane.b32.xlu0 %v293, 32
    %v327 = vpop.permute.xlu0 %326
    %328 = vrot.lane.b32.xlu0 %v297, 32
    %v329 = vpop.permute.xlu0 %328
    %v330 = vsel %vm32, %v327, %v329
    %v333 = vsel %vm32, %v288, 0
    %335 = vmatprep.subr.mxu0 0.0
    %336 = vmatpush1.msra.mxu0 0.0
    %337 = vmatprep.subr.mxu0 0.0
    %338 = vmatpush1.msra.mxu0 0.0
    %339 = vmatprep.subr.mxu0 0.0
    %340 = vmatpush1.msra.mxu0 0.0
    %341 = vmatprep.subr.mxu0 0.0
    %342 = vmatpush1.msra.mxu0 0.0
    %343 = vmatprep.subr.mxu0 0.0
    %344 = vmatpush1.msra.mxu0 0.0
    %345 = vmatprep.subr.mxu0 0.0
    %346 = vmatpush1.msra.mxu0 0.0
    %347 = vmatprep.subr.mxu0 0.0
    %348 = vmatpush1.msra.mxu0 0.0
    %349 = vmatprep.subr.mxu0 0.0
    %350 = vmatpush1.msra.mxu0 0.0
    %351 = vmatprep.subr.mxu0 0.0
    %352 = vmatpush1.msra.mxu0 0.0
    %353 = vmatprep.subr.mxu0 0.0
    %354 = vmatpush1.msra.mxu0 0.0
    %355 = vmatprep.subr.mxu0 0.0
    %356 = vmatpush1.msra.mxu0 0.0
    %357 = vmatprep.subr.mxu0 0.0
    %358 = vmatpush1.msra.mxu0 0.0
    %359 = vmatprep.subr.mxu0 0.0
    %360 = vmatpush1.msra.mxu0 %v321
    %361 = vmatprep.subr.mxu0 0.0
    %362 = vmatpush1.msra.mxu0 %v320
    %363 = vmatprep.subr.mxu0 0.0
    %364 = vmatpush1.msra.mxu0 %v319
    %365 = vmatprep.subr.mxu0 0.0
    %366 = vmatpush1.msra.mxu0 %v318
    %367 = vmatprep.subr.mxu0 0.0
    %368 = vmatpush2.msra.mxu0 0.0
    %369 = vmatprep.subr.mxu0 0.0
    %370 = vmatpush2.msra.mxu0 0.0
    %371 = vmatprep.subr.mxu0 0.0
    %372 = vmatpush2.msra.mxu0 0.0
    %373 = vmatprep.subr.mxu0 0.0
    %374 = vmatpush2.msra.mxu0 0.0
    %375 = vmatprep.subr.mxu0 0.0
    %376 = vmatpush2.msra.mxu0 0.0
    %377 = vmatprep.subr.mxu0 0.0
    %378 = vmatpush2.msra.mxu0 0.0
    %379 = vmatprep.subr.mxu0 0.0
    %380 = vmatpush2.msra.mxu0 0.0
    %381 = vmatprep.subr.mxu0 0.0
    %382 = vmatpush2.msra.mxu0 0.0
    %383 = vmatprep.subr.mxu0 0.0
    %384 = vmatpush2.msra.mxu0 0.0
    %385 = vmatprep.subr.mxu0 0.0
    %386 = vmatpush2.msra.mxu0 0.0
    %387 = vmatprep.subr.mxu0 0.0
    %388 = vmatpush2.msra.mxu0 0.0
    %389 = vmatprep.subr.mxu0 0.0
    %390 = vmatpush2.msra.mxu0 0.0
    %391 = vmatprep.subr.mxu0 0.0
    %392 = vmatpush2.msra.mxu0 0.0
    %393 = vmatprep.subr.mxu0 0.0
    %394 = vmatpush2.msra.mxu0 0.0
    %395 = vmatprep.subr.mxu0 0.0
    %396 = vmatpush2.msra.mxu0 0.0
    %397 = vmatprep.subr.mxu0 0.0
    %398 = vmatpush2.msra.mxu0 0.0
    %399 = vmatprep.mubr.f32.mxu0 0.0
    %400 = vmatmul.mubr.f32.gmra.mxu0 %v333
    %v401 = vpop.f32.mrf.mxu0
    %v402 = vadd.f32 %v330, %v401
    %v403 = vpop.f32.mrf.mxu0
    %404 = vdwg.mxu0
    %405 = vst [vmem:[#allocation2] sm:$0xff] %v402
    // Predicated region
    $region14: #{sf_net_forward.1} parent=1 // pred_check
      _
    $region15: #{sf_net_forward.1} parent=1 // pred_check_branch
      %407 = sbr.rel (0) target = $region17
    $region16: #{sf_net_forward.1} parent=1 // pred_region
      %s409 = ssub.s32 128, 128
      %410 = vsyncadd [#allocation3], %s409
      %s412 = sshll.u32 [#allocation2], 4
      %s413 = int_to_ptr.vmem [resolvable:$true] %s412
      %415 = dma.vmem_to_hbm [thread:$0]  %s413, 128, %s3, [#allocation3]
    $region17: #{sf_net_forward.1} parent=1 // pred_fallthru
      _
    // Predicated region
    $region18: #{sf_net_forward.1} parent=1 // pred_check
      _
    $region19: #{sf_net_forward.1} parent=1 // pred_check_branch
      %417 = sbr.rel (0) target = $region21
    $region20: #{sf_net_forward.1} parent=1 // pred_region
      %418 = dma.done [#allocation3], 128
    $region21: #{sf_net_forward.1} parent=1 // pred_fallthru
      _
    %419 = vsyncpa [#allocation3], 1

</llo_original>
